<compile_context>
chip_gen: v7x
topology: tpu7x:2x2x1
jax: 0.10.0
libtpu: 0.0.40
codegen_flags: <defaults>
</compile_context>

<pallas_src>
import functools
import math

import jax
import jax.numpy as jnp
from jax import lax
from jax.experimental import pallas as pl
from jax.experimental.pallas import tpu as pltpu


def _log_sigmoid(x):
    # log(sigmoid(x)) = min(x, 0) - log(1 + exp(-|x|)); stable for any x.
    return jnp.minimum(x, 0.0) - jnp.log(1.0 + jnp.exp(-jnp.abs(x)))


def _neg_sampling_loss_kernel(embeds_ref, tails_ref, neg_tails_ref, w_ref,
                              out_ref, *, num_heads_total):
    tn = embeds_ref.shape[0]
    num_nodes = w_ref.shape[0]
    k = neg_tails_ref.shape[1]

    e = embeds_ref[...].astype(jnp.float32)            # (TN, D)
    w = w_ref[...].astype(jnp.float32)                 # (num_nodes, D)

    # Scores of every head in this tile against every node, on the MXU.
    s = jnp.dot(e, w.T, preferred_element_type=jnp.float32,
                precision=lax.Precision.HIGHEST)       # (TN, num_nodes)

    col = lax.broadcasted_iota(jnp.int32, (tn, num_nodes), 1)

    # positive term: log_sigmoid(S[i, tails[i]])
    tails = tails_ref[...]                             # (TN, 1) int32
    pos_score = jnp.sum(jnp.where(col == tails, s, 0.0),
                        axis=1, keepdims=True)         # (TN, 1)
    loss = _log_sigmoid(pos_score)

    # negative term: sum_k log_sigmoid(-S[i, neg_tails[i, k]]); K is small & static.
    for kk in range(k):
        nk = neg_tails_ref[:, kk:kk + 1]               # (TN, 1) int32
        neg_score = jnp.sum(jnp.where(col == nk, s, 0.0),
                            axis=1, keepdims=True)     # (TN, 1)
        loss = loss + _log_sigmoid(-neg_score)

    # zero out padded heads so the host-side global sum is exact
    row = pl.program_id(0) * tn + lax.broadcasted_iota(jnp.int32, (tn, 1), 0)
    out_ref[...] = jnp.where(row < num_heads_total, loss, 0.0)


def _round_up(x, m):
    return (x + m - 1) // m * m


def negative_sampling_loss(weights, embeds, tails, neg_tails, *, tile_n=256):
    """weights: (num_nodes, D); embeds: (N, D); tails: (N,) int;
    neg_tails: (N, K) int.  Returns scalar loss (float32)."""
    num_nodes, d = weights.shape
    n = embeds.shape[0]
    k = neg_tails.shape[1]

    tn = min(tile_n, _round_up(n, 8))
    n_pad = _round_up(n, tn)
    num_tiles = n_pad // tn

    tails2d = tails.astype(jnp.int32).reshape(n, 1)
    negs2d = neg_tails.astype(jnp.int32).reshape(n, k)
    if n_pad != n:
        pad = n_pad - n
        embeds = jnp.pad(embeds, ((0, pad), (0, 0)))
        tails2d = jnp.pad(tails2d, ((0, pad), (0, 0)))
        negs2d = jnp.pad(negs2d, ((0, pad), (0, 0)))

    # VMEM budget: resident weights + double-buffered tiles + score-matrix slack,
    # capped at v7x's 64 MiB physical VMEM.
    est = (2 * num_nodes * d * 4
           + 4 * tn * (d + 1 + k + 1) * 4
           + 4 * tn * num_nodes * 4
           + (8 << 20))
    vmem_limit = int(min(64 << 20, max(32 << 20, est)))

    cost = pl.CostEstimate(
        flops=2 * n_pad * num_nodes * d + 3 * (k + 1) * n_pad * num_nodes,
        transcendentals=2 * (k + 1) * n_pad,
        bytes_accessed=4 * (n_pad * d + num_nodes * d + n_pad * (k + 2)),
    )

    kernel = functools.partial(_neg_sampling_loss_kernel, num_heads_total=n)

    per_head = pl.pallas_call(
        kernel,
        out_shape=jax.ShapeDtypeStruct((n_pad, 1), jnp.float32),
        grid_spec=pltpu.PrefetchScalarGridSpec(
            num_scalar_prefetch=0,
            grid=(num_tiles,),
            in_specs=[
                pl.BlockSpec((tn, d), lambda i: (i, 0)),         # embeds tile
                pl.BlockSpec((tn, 1), lambda i: (i, 0)),         # tails tile
                pl.BlockSpec((tn, k), lambda i: (i, 0)),         # neg_tails tile
                pl.BlockSpec((num_nodes, d), lambda i: (0, 0)),  # weights (resident)
            ],
            out_specs=pl.BlockSpec((tn, 1), lambda i: (i, 0)),
        ),
        compiler_params=pltpu.CompilerParams(
            dimension_semantics=("parallel",),
            vmem_limit_bytes=vmem_limit,
        ),
        cost_estimate=cost,
    )(embeds, tails2d, negs2d, weights)

    # Global num_heads (NOT the tile size) — matches the PyTorch module.
    return -jnp.sum(per_head) / n


if __name__ == "__main__":
    # small shapes consistent with the module
    num_nodes = 64
    embedding_dim = 32
    num_heads = 8
    num_neg_samples = 4

    key = jax.random.PRNGKey(0)
    k_w, k_e, k_t, k_n = jax.random.split(key, 4)

    # nn.init.normal_(weights, std=1/sqrt(embedding_dim)), deterministic
    weights = (jax.random.normal(k_w, (num_nodes, embedding_dim), jnp.float32)
               / math.sqrt(embedding_dim))
    embeds = jax.random.normal(k_e, (num_heads, embedding_dim), jnp.float32)
    heads = jnp.arange(num_heads, dtype=jnp.int32)  # only its length is used
    tails = jax.random.randint(k_t, (num_heads,), 0, num_nodes, dtype=jnp.int32)

    # dist == 'uniform' path: torch.randint(0, num_nodes, (N*K,)).view(N, K)
    # TODO(synk): 'degree' multinomial sampling path (needs a DGL graph) not implemented.
    neg_tails = jax.random.randint(
        k_n, (num_heads * num_neg_samples,), 0, num_nodes, dtype=jnp.int32
    ).reshape(num_heads, num_neg_samples)

    loss = negative_sampling_loss(weights, embeds, tails, neg_tails)
    jax.block_until_ready(loss)

    # pure-JAX reference (same math as the PyTorch forward, same sampled indices)
    tail_w_ref = weights[tails]
    log_target = jax.nn.log_sigmoid(jnp.sum(embeds * tail_w_ref, axis=1))
    noise = -weights[neg_tails]
    sum_log = jnp.sum(
        jax.nn.log_sigmoid(jnp.einsum("nkd,nd->nk", noise, embeds,
                                      precision=lax.Precision.HIGHEST)),
        axis=1)
    ref = -(log_target + sum_log).sum() / num_heads
    # tolerance allows for MXU matmul rounding inside the kernel
    assert jnp.allclose(loss, ref, atol=1e-3, rtol=1e-3), (float(loss), float(ref))

    print("KERNEL_OK")
</pallas_src>

<mosaic_0001>
module attributes {stable_mosaic.version = 11 : i64} {
  func.func @_neg_sampling_loss_kernel(%arg0: i32, %arg1: memref<8x32xf32, #tpu.memory_space<vmem>>, %arg2: memref<8x1xi32, #tpu.memory_space<vmem>>, %arg3: memref<8x4xi32, #tpu.memory_space<vmem>>, %arg4: memref<64x32xf32, #tpu.memory_space<vmem>>, %arg5: memref<8x1xf32, #tpu.memory_space<vmem>>) attributes {dimension_semantics = [#tpu.dimension_semantics<parallel>], iteration_bounds = array<i64: 1>, scalar_prefetch = 0 : i64, scratch_operands = 0 : i64, tpu.core_type = #tpu.core_type<tc>, window_params = [{transform_indices = @transform_0, window_bounds = array<i64: 8, 32>}, {transform_indices = @transform_1, window_bounds = array<i64: 8, 1>}, {transform_indices = @transform_2, window_bounds = array<i64: 8, 4>}, {pipeline_mode = #tpu.pipeline_mode<synchronous>, transform_indices = @transform_3, window_bounds = array<i64: 64, 32>}, {transform_indices = @transform_4, window_bounds = array<i64: 8, 1>}]} {
    %c0 = arith.constant 0 : index
    %c0_0 = arith.constant 0 : index
    %0 = vector.load %arg1[%c0, %c0_0] : memref<8x32xf32, #tpu.memory_space<vmem>>, vector<8x32xf32>
    %c0_1 = arith.constant 0 : index
    %c0_2 = arith.constant 0 : index
    %1 = vector.load %arg4[%c0_1, %c0_2] : memref<64x32xf32, #tpu.memory_space<vmem>>, vector<64x32xf32>
    %2 = tpu.transpose %1, [1, 0] : vector<64x32xf32> -> vector<32x64xf32>
    %cst = arith.constant dense<0.000000e+00> : vector<8x64xf32>
    %3 = tpu.matmul %0, %2, %cst {dimension_numbers = #tpu.dot_dimension_numbers<[1], [0], [0], [1], [0, 0, 1, 1], [], []>, precision = #tpu.contract_precision<fp32>} : vector<8x32xf32>, vector<32x64xf32>, vector<8x64xf32> -> vector<8x64xf32>
    %4 = tpu.iota {dimensions = array<i32: 1>} : vector<8x64xi32>
    %c0_3 = arith.constant 0 : index
    %c0_4 = arith.constant 0 : index
    %5 = vector.load %arg2[%c0_3, %c0_4] : memref<8x1xi32, #tpu.memory_space<vmem>>, vector<8x1xi32>
    %6 = vector.broadcast %5 : vector<8x1xi32> to vector<8x64xi32>
    %7 = arith.cmpi eq, %4, %6 : vector<8x64xi32>
    %cst_5 = arith.constant 0.000000e+00 : f32
    %8 = vector.broadcast %cst_5 : f32 to vector<8x64xf32>
    %9 = arith.select %7, %3, %8 : vector<8x64xi1>, vector<8x64xf32>
    %cst_6 = arith.constant dense<0.000000e+00> : vector<8xf32>
    %10 = vector.multi_reduction <add>, %9, %cst_6 [1] : vector<8x64xf32> to vector<8xf32>
    %11 = vector.shape_cast %10 : vector<8xf32> to vector<8x1xf32>
    %cst_7 = arith.constant 0.000000e+00 : f32
    %12 = vector.broadcast %cst_7 : f32 to vector<8x1xf32>
    %13 = arith.minimumf %11, %12 : vector<8x1xf32>
    %14 = math.absf %11 : vector<8x1xf32>
    %cst_8 = arith.constant 0.000000e+00 : f32
    %15 = vector.broadcast %cst_8 : f32 to vector<8x1xf32>
    %16 = arith.subf %15, %14 : vector<8x1xf32>
    %17 = math.exp %16 : vector<8x1xf32>
    %cst_9 = arith.constant 1.000000e+00 : f32
    %18 = vector.broadcast %cst_9 : f32 to vector<8x1xf32>
    %19 = arith.addf %18, %17 : vector<8x1xf32>
    %20 = math.log %19 : vector<8x1xf32>
    %21 = arith.subf %13, %20 : vector<8x1xf32>
    %c0_10 = arith.constant 0 : index
    %c0_11 = arith.constant 0 : index
    %22 = vector.load %arg3[%c0_10, %c0_11] : memref<8x4xi32, #tpu.memory_space<vmem>>, vector<8x1xi32>
    %23 = vector.broadcast %22 : vector<8x1xi32> to vector<8x64xi32>
    %24 = arith.cmpi eq, %4, %23 : vector<8x64xi32>
    %cst_12 = arith.constant 0.000000e+00 : f32
    %25 = vector.broadcast %cst_12 : f32 to vector<8x64xf32>
    %26 = arith.select %24, %3, %25 : vector<8x64xi1>, vector<8x64xf32>
    %cst_13 = arith.constant dense<0.000000e+00> : vector<8xf32>
    %27 = vector.multi_reduction <add>, %26, %cst_13 [1] : vector<8x64xf32> to vector<8xf32>
    %28 = vector.shape_cast %27 : vector<8xf32> to vector<8x1xf32>
    %cst_14 = arith.constant 0.000000e+00 : f32
    %29 = vector.broadcast %cst_14 : f32 to vector<8x1xf32>
    %30 = arith.subf %29, %28 : vector<8x1xf32>
    %cst_15 = arith.constant 0.000000e+00 : f32
    %31 = vector.broadcast %cst_15 : f32 to vector<8x1xf32>
    %32 = arith.minimumf %30, %31 : vector<8x1xf32>
    %33 = math.absf %30 : vector<8x1xf32>
    %cst_16 = arith.constant 0.000000e+00 : f32
    %34 = vector.broadcast %cst_16 : f32 to vector<8x1xf32>
    %35 = arith.subf %34, %33 : vector<8x1xf32>
    %36 = math.exp %35 : vector<8x1xf32>
    %cst_17 = arith.constant 1.000000e+00 : f32
    %37 = vector.broadcast %cst_17 : f32 to vector<8x1xf32>
    %38 = arith.addf %37, %36 : vector<8x1xf32>
    %39 = math.log %38 : vector<8x1xf32>
    %40 = arith.subf %32, %39 : vector<8x1xf32>
    %41 = arith.addf %21, %40 : vector<8x1xf32>
    %c0_18 = arith.constant 0 : index
    %c1 = arith.constant 1 : index
    %42 = vector.load %arg3[%c0_18, %c1] : memref<8x4xi32, #tpu.memory_space<vmem>>, vector<8x1xi32>
    %43 = vector.broadcast %42 : vector<8x1xi32> to vector<8x64xi32>
    %44 = arith.cmpi eq, %4, %43 : vector<8x64xi32>
    %cst_19 = arith.constant 0.000000e+00 : f32
    %45 = vector.broadcast %cst_19 : f32 to vector<8x64xf32>
    %46 = arith.select %44, %3, %45 : vector<8x64xi1>, vector<8x64xf32>
    %cst_20 = arith.constant dense<0.000000e+00> : vector<8xf32>
    %47 = vector.multi_reduction <add>, %46, %cst_20 [1] : vector<8x64xf32> to vector<8xf32>
    %48 = vector.shape_cast %47 : vector<8xf32> to vector<8x1xf32>
    %cst_21 = arith.constant 0.000000e+00 : f32
    %49 = vector.broadcast %cst_21 : f32 to vector<8x1xf32>
    %50 = arith.subf %49, %48 : vector<8x1xf32>
    %cst_22 = arith.constant 0.000000e+00 : f32
    %51 = vector.broadcast %cst_22 : f32 to vector<8x1xf32>
    %52 = arith.minimumf %50, %51 : vector<8x1xf32>
    %53 = math.absf %50 : vector<8x1xf32>
    %cst_23 = arith.constant 0.000000e+00 : f32
    %54 = vector.broadcast %cst_23 : f32 to vector<8x1xf32>
    %55 = arith.subf %54, %53 : vector<8x1xf32>
    %56 = math.exp %55 : vector<8x1xf32>
    %cst_24 = arith.constant 1.000000e+00 : f32
    %57 = vector.broadcast %cst_24 : f32 to vector<8x1xf32>
    %58 = arith.addf %57, %56 : vector<8x1xf32>
    %59 = math.log %58 : vector<8x1xf32>
    %60 = arith.subf %52, %59 : vector<8x1xf32>
    %61 = arith.addf %41, %60 : vector<8x1xf32>
    %c0_25 = arith.constant 0 : index
    %c2 = arith.constant 2 : index
    %62 = vector.load %arg3[%c0_25, %c2] : memref<8x4xi32, #tpu.memory_space<vmem>>, vector<8x1xi32>
    %63 = vector.broadcast %62 : vector<8x1xi32> to vector<8x64xi32>
    %64 = arith.cmpi eq, %4, %63 : vector<8x64xi32>
    %cst_26 = arith.constant 0.000000e+00 : f32
    %65 = vector.broadcast %cst_26 : f32 to vector<8x64xf32>
    %66 = arith.select %64, %3, %65 : vector<8x64xi1>, vector<8x64xf32>
    %cst_27 = arith.constant dense<0.000000e+00> : vector<8xf32>
    %67 = vector.multi_reduction <add>, %66, %cst_27 [1] : vector<8x64xf32> to vector<8xf32>
    %68 = vector.shape_cast %67 : vector<8xf32> to vector<8x1xf32>
    %cst_28 = arith.constant 0.000000e+00 : f32
    %69 = vector.broadcast %cst_28 : f32 to vector<8x1xf32>
    %70 = arith.subf %69, %68 : vector<8x1xf32>
    %cst_29 = arith.constant 0.000000e+00 : f32
    %71 = vector.broadcast %cst_29 : f32 to vector<8x1xf32>
    %72 = arith.minimumf %70, %71 : vector<8x1xf32>
    %73 = math.absf %70 : vector<8x1xf32>
    %cst_30 = arith.constant 0.000000e+00 : f32
    %74 = vector.broadcast %cst_30 : f32 to vector<8x1xf32>
    %75 = arith.subf %74, %73 : vector<8x1xf32>
    %76 = math.exp %75 : vector<8x1xf32>
    %cst_31 = arith.constant 1.000000e+00 : f32
    %77 = vector.broadcast %cst_31 : f32 to vector<8x1xf32>
    %78 = arith.addf %77, %76 : vector<8x1xf32>
    %79 = math.log %78 : vector<8x1xf32>
    %80 = arith.subf %72, %79 : vector<8x1xf32>
    %81 = arith.addf %61, %80 : vector<8x1xf32>
    %c0_32 = arith.constant 0 : index
    %c3 = arith.constant 3 : index
    %82 = vector.load %arg3[%c0_32, %c3] : memref<8x4xi32, #tpu.memory_space<vmem>>, vector<8x1xi32>
    %83 = vector.broadcast %82 : vector<8x1xi32> to vector<8x64xi32>
    %84 = arith.cmpi eq, %4, %83 : vector<8x64xi32>
    %cst_33 = arith.constant 0.000000e+00 : f32
    %85 = vector.broadcast %cst_33 : f32 to vector<8x64xf32>
    %86 = arith.select %84, %3, %85 : vector<8x64xi1>, vector<8x64xf32>
    %cst_34 = arith.constant dense<0.000000e+00> : vector<8xf32>
    %87 = vector.multi_reduction <add>, %86, %cst_34 [1] : vector<8x64xf32> to vector<8xf32>
    %88 = vector.shape_cast %87 : vector<8xf32> to vector<8x1xf32>
    %cst_35 = arith.constant 0.000000e+00 : f32
    %89 = vector.broadcast %cst_35 : f32 to vector<8x1xf32>
    %90 = arith.subf %89, %88 : vector<8x1xf32>
    %cst_36 = arith.constant 0.000000e+00 : f32
    %91 = vector.broadcast %cst_36 : f32 to vector<8x1xf32>
    %92 = arith.minimumf %90, %91 : vector<8x1xf32>
    %93 = math.absf %90 : vector<8x1xf32>
    %cst_37 = arith.constant 0.000000e+00 : f32
    %94 = vector.broadcast %cst_37 : f32 to vector<8x1xf32>
    %95 = arith.subf %94, %93 : vector<8x1xf32>
    %96 = math.exp %95 : vector<8x1xf32>
    %cst_38 = arith.constant 1.000000e+00 : f32
    %97 = vector.broadcast %cst_38 : f32 to vector<8x1xf32>
    %98 = arith.addf %97, %96 : vector<8x1xf32>
    %99 = math.log %98 : vector<8x1xf32>
    %100 = arith.subf %92, %99 : vector<8x1xf32>
    %101 = arith.addf %81, %100 : vector<8x1xf32>
    %c8_i32 = arith.constant 8 : i32
    %102 = arith.muli %arg0, %c8_i32 : i32
    %103 = tpu.iota {dimensions = array<i32: 0>} : vector<8x1xi32>
    %104 = vector.broadcast %102 : i32 to vector<8x1xi32>
    %105 = arith.addi %104, %103 : vector<8x1xi32>
    %c8_i32_39 = arith.constant 8 : i32
    %106 = vector.broadcast %c8_i32_39 : i32 to vector<8x1xi32>
    %107 = arith.cmpi slt, %105, %106 : vector<8x1xi32>
    %cst_40 = arith.constant 0.000000e+00 : f32
    %108 = vector.broadcast %cst_40 : f32 to vector<8x1xf32>
    %109 = arith.select %107, %101, %108 : vector<8x1xi1>, vector<8x1xf32>
    %c0_41 = arith.constant 0 : index
    %c0_42 = arith.constant 0 : index
    %110 = vector.load %arg5[%c0_41, %c0_42] : memref<8x1xf32, #tpu.memory_space<vmem>>, vector<8x1xf32>
    tpu.vector_store %arg5[%c0_41, %c0_42], %109 {strides = array<i32>} : memref<8x1xf32, #tpu.memory_space<vmem>>, vector<8x1xf32>,
    return
  }
  func.func @transform_0(%arg0: i32) -> (i32, i32) {
    %c0_i32 = arith.constant 0 : i32
    %c0_i32_0 = arith.constant 0 : i32
    return %arg0, %c0_i32 : i32, i32
  }
  func.func @transform_1(%arg0: i32) -> (i32, i32) {
    %c0_i32 = arith.constant 0 : i32
    %c0_i32_0 = arith.constant 0 : i32
    return %arg0, %c0_i32 : i32, i32
  }
  func.func @transform_2(%arg0: i32) -> (i32, i32) {
    %c0_i32 = arith.constant 0 : i32
    %c0_i32_0 = arith.constant 0 : i32
    return %arg0, %c0_i32 : i32, i32
  }
  func.func @transform_3(%arg0: i32) -> (i32, i32) {
    %c0_i32 = arith.constant 0 : i32
    %c0_i32_0 = arith.constant 0 : i32
    %c0_i32_1 = arith.constant 0 : i32
    return %c0_i32, %c0_i32_0 : i32, i32
  }
  func.func @transform_4(%arg0: i32) -> (i32, i32) {
    %c0_i32 = arith.constant 0 : i32
    %c0_i32_0 = arith.constant 0 : i32
    return %arg0, %c0_i32 : i32, i32
  }
}

</mosaic_0001>

<llo_original>
// kernel: tpu_custom_call.1
$region0: #{tpu_custom_call.1}
  #allocation0 [shape = 'u32[]', space=smem, size = 0x4, offset = 0x4, fixed_abs, tag = 'smem constant byte address 0x4 - core index']
  #allocation1 [shape = 'u32[144,128]{1,0:T(1,128)}', space=vmem, size = 0x12000, scoped, tag = 'internal scratch']
  %s0 = inlined_call_operand.vmem [shape: f32[8,32], index: 0, kind: input, shape index: {}]
  %s1 = inlined_call_operand.vmem [shape: s32[8,1], index: 1, kind: input, shape index: {}]
  %s2 = inlined_call_operand.vmem [shape: s32[8,4], index: 2, kind: input, shape index: {}]
  %s3 = inlined_call_operand.vmem [shape: f32[64,32], index: 3, kind: input, shape index: {}]
  %s4 = inlined_call_operand.vmem [shape: f32[8,1], index: 4, kind: output, shape index: {}]
  %s5 = sld [smem:[#allocation0]]
  $region26: #{tpu_custom_call.1} parent=0
    _
  %s7 = ssub.s32 1, %s5
  %s8 = scalar_select 0, %s7, %s5
  // Predicated region
  $region2: #{tpu_custom_call.1} parent=0 // pred_check
    _
  $region3: #{tpu_custom_call.1} parent=0 // pred_check_branch
    %10 = sbr.rel (0) target = $region5
  $region4: #{tpu_custom_call.1} parent=0 // pred_region
    _
  $region5: #{tpu_custom_call.1} parent=0 // pred_fallthru
    _
  // Predicated region
  $region6: #{tpu_custom_call.1} parent=0 // pred_check
    _
  $region7: #{tpu_custom_call.1} parent=0 // pred_check_branch
    %12 = sbr.rel (0) target = $region9
  $region8: #{tpu_custom_call.1} parent=0 // pred_region
    _
  $region9: #{tpu_custom_call.1} parent=0 // pred_fallthru
    _
  // Predicated region
  $region10: #{tpu_custom_call.1} parent=0 // pred_check
    _
  $region11: #{tpu_custom_call.1} parent=0 // pred_check_branch
    %14 = sbr.rel (0) target = $region13
  $region12: #{tpu_custom_call.1} parent=0 // pred_region
    _
  $region13: #{tpu_custom_call.1} parent=0 // pred_fallthru
    _
  // Predicated region
  $region14: #{tpu_custom_call.1} parent=0 // pred_check
    _
  $region15: #{tpu_custom_call.1} parent=0 // pred_check_branch
    %16 = sbr.rel (0) target = $region17
  $region16: #{tpu_custom_call.1} parent=0 // pred_region
    _
  $region17: #{tpu_custom_call.1} parent=0 // pred_fallthru
    _
  %v17 = vld [vmem:[%s0] sm:$0xff]
  %v18 = vld [vmem:[%s3] sm:$0xff]
  %v19 = vld [vmem:[%s3 + $0x8] sm:$0xff]
  %v20 = vld [vmem:[%s3 + $0x10] sm:$0xff]
  %v21 = vld [vmem:[%s3 + $0x18] sm:$0xff]
  %v22 = vld [vmem:[%s3 + $0x20] sm:$0xff]
  %v23 = vld [vmem:[%s3 + $0x28] sm:$0xff]
  %v24 = vld [vmem:[%s3 + $0x30] sm:$0xff]
  %v25 = vld [vmem:[%s3 + $0x38] sm:$0xff]
  %vm26 = vcmask 261120
  %v28 = vsel %vm26, %v17, 0
  %v31 = vsel %vm26, %v18, 0
  %v34 = vsel %vm26, %v19, 0
  %v37 = vsel %vm26, %v20, 0
  %v40 = vsel %vm26, %v21, 0
  %v43 = vsel %vm26, %v22, 0
  %v46 = vsel %vm26, %v23, 0
  %v49 = vsel %vm26, %v24, 0
  %v52 = vsel %vm26, %v25, 0
  %54 = vmatprep.subr.mxu0 0.0
  %v55 = vand.u32 %v31, 4294901760
  %56 = vmatpush1.xpose.msra.mxu0 %v55
  %57 = vmatprep.subr.mxu0 0.0
  %v58 = vand.u32 %v34, 4294901760
  %59 = vmatpush1.xpose.msra.mxu0 %v58
  %60 = vmatprep.subr.mxu0 0.0
  %v61 = vand.u32 %v37, 4294901760
  %62 = vmatpush1.xpose.msra.mxu0 %v61
  %63 = vmatprep.subr.mxu0 0.0
  %v64 = vand.u32 %v40, 4294901760
  %65 = vmatpush1.xpose.msra.mxu0 %v64
  %66 = vmatprep.subr.mxu0 0.0
  %v67 = vand.u32 %v43, 4294901760
  %68 = vmatpush1.xpose.msra.mxu0 %v67
  %69 = vmatprep.subr.mxu0 0.0
  %v70 = vand.u32 %v46, 4294901760
  %71 = vmatpush1.xpose.msra.mxu0 %v70
  %72 = vmatprep.subr.mxu0 0.0
  %v73 = vand.u32 %v49, 4294901760
  %74 = vmatpush1.xpose.msra.mxu0 %v73
  %75 = vmatprep.subr.mxu0 0.0
  %v76 = vand.u32 %v52, 4294901760
  %77 = vmatpush1.xpose.msra.mxu0 %v76
  %78 = vmatprep.subr.mxu0 0.0
  %79 = vmatpush1.xpose.msra.mxu0 0.0
  %80 = vmatprep.subr.mxu0 0.0
  %81 = vmatpush1.xpose.msra.mxu0 0.0
  %82 = vmatprep.subr.mxu0 0.0
  %83 = vmatpush1.xpose.msra.mxu0 0.0
  %84 = vmatprep.subr.mxu0 0.0
  %85 = vmatpush1.xpose.msra.mxu0 0.0
  %86 = vmatprep.subr.mxu0 0.0
  %87 = vmatpush1.xpose.msra.mxu0 0.0
  %88 = vmatprep.subr.mxu0 0.0
  %89 = vmatpush1.xpose.msra.mxu0 0.0
  %90 = vmatprep.subr.mxu0 0.0
  %91 = vmatpush1.xpose.msra.mxu0 0.0
  %92 = vmatprep.subr.mxu0 0.0
  %93 = vmatpush1.xpose.msra.mxu0 0.0
  %94 = vmatprep.subr.mxu0 0.0
  %95 = vmatpush1.xpose.msra.mxu0 0.0
  %96 = vmatprep.subr.mxu0 0.0
  %97 = vmatpush1.xpose.msra.mxu0 0.0
  %98 = vmatprep.subr.mxu0 0.0
  %99 = vmatpush1.xpose.msra.mxu0 0.0
  %100 = vmatprep.subr.mxu0 0.0
  %101 = vmatpush1.xpose.msra.mxu0 0.0
  %102 = vmatprep.subr.mxu0 0.0
  %103 = vmatpush1.xpose.msra.mxu0 0.0
  %104 = vmatprep.subr.mxu0 0.0
  %105 = vmatpush1.xpose.msra.mxu0 0.0
  %106 = vmatprep.subr.mxu0 0.0
  %107 = vmatpush1.xpose.msra.mxu0 0.0
  %108 = vmatprep.subr.mxu0 0.0
  %109 = vmatpush1.xpose.msra.mxu0 0.0
  %110 = vmatprep.subr.mxu0 0.0
  %111 = vmatpush1.xpose.msra.mxu0 0.0
  %112 = vmatprep.subr.mxu0 0.0
  %113 = vmatpush1.xpose.msra.mxu0 0.0
  %114 = vmatprep.subr.mxu0 0.0
  %115 = vmatpush1.xpose.msra.mxu0 0.0
  %116 = vmatprep.subr.mxu0 0.0
  %117 = vmatpush1.xpose.msra.mxu0 0.0
  %118 = vmatprep.subr.mxu0 0.0
  %119 = vmatpush1.xpose.msra.mxu0 0.0
  %120 = vmatprep.subr.mxu0 0.0
  %121 = vmatpush1.xpose.msra.mxu0 0.0
  %122 = vmatprep.subr.mxu0 0.0
  %123 = vmatpush1.xpose.msra.mxu0 0.0
  %124 = vmatprep.subr.mxu0 0.0
  %125 = vmatpush1.xpose.msra.mxu0 0.0
  %126 = vmatprep.mubr.f32.mxu0 0.0
  %v127 = vand.u32 %v28, 4294901760
  %v128 = vsub.f32 %v28, %v127
  %v129 = vand.u32 %v128, 4294901760
  %v130 = vsub.f32 %v128, %v129
  %v131 = vand.u32 %v130, 4294901760
  %132 = vmatmul.mubr.f32.gmra.mrb[0].mxu0 %v131
  %v133 = vpop.f32.mrb[0].mxu0
  %v134 = vadd.f32 0.0, %v133
  %v135 = vpop.f32.mrb[0].mxu0
  %136 = vdwg.mxu0
  %137 = vmatprep.subr.mxu0 0.0
  %v138 = vand.u32 %v31, 4294901760
  %v139 = vsub.f32 %v31, %v138
  %v140 = vand.u32 %v139, 4294901760
  %v141 = vsub.f32 %v139, %v140
  %v142 = vand.u32 %v141, 4294901760
  %143 = vmatpush1.xpose.msra.mxu0 %v142
  %144 = vmatprep.subr.mxu0 0.0
  %v145 = vand.u32 %v34, 4294901760
  %v146 = vsub.f32 %v34, %v145
  %v147 = vand.u32 %v146, 4294901760
  %v148 = vsub.f32 %v146, %v147
  %v149 = vand.u32 %v148, 4294901760
  %150 = vmatpush1.xpose.msra.mxu0 %v149
  %151 = vmatprep.subr.mxu0 0.0
  %v152 = vand.u32 %v37, 4294901760
  %v153 = vsub.f32 %v37, %v152
  %v154 = vand.u32 %v153, 4294901760
  %v155 = vsub.f32 %v153, %v154
  %v156 = vand.u32 %v155, 4294901760
  %157 = vmatpush1.xpose.msra.mxu0 %v156
  %158 = vmatprep.subr.mxu0 0.0
  %v159 = vand.u32 %v40, 4294901760
  %v160 = vsub.f32 %v40, %v159
  %v161 = vand.u32 %v160, 4294901760
  %v162 = vsub.f32 %v160, %v161
  %v163 = vand.u32 %v162, 4294901760
  %164 = vmatpush1.xpose.msra.mxu0 %v163
  %165 = vmatprep.subr.mxu0 0.0
  %v166 = vand.u32 %v43, 4294901760
  %v167 = vsub.f32 %v43, %v166
  %v168 = vand.u32 %v167, 4294901760
  %v169 = vsub.f32 %v167, %v168
  %v170 = vand.u32 %v169, 4294901760
  %171 = vmatpush1.xpose.msra.mxu0 %v170
  %172 = vmatprep.subr.mxu0 0.0
  %v173 = vand.u32 %v46, 4294901760
  %v174 = vsub.f32 %v46, %v173
  %v175 = vand.u32 %v174, 4294901760
  %v176 = vsub.f32 %v174, %v175
  %v177 = vand.u32 %v176, 4294901760
  %178 = vmatpush1.xpose.msra.mxu0 %v177
  %179 = vmatprep.subr.mxu0 0.0
  %v180 = vand.u32 %v49, 4294901760
  %v181 = vsub.f32 %v49, %v180
  %v182 = vand.u32 %v181, 4294901760
  %v183 = vsub.f32 %v181, %v182
  %v184 = vand.u32 %v183, 4294901760
  %185 = vmatpush1.xpose.msra.mxu0 %v184
  %186 = vmatprep.subr.mxu0 0.0
  %v187 = vand.u32 %v52, 4294901760
  %v188 = vsub.f32 %v52, %v187
  %v189 = vand.u32 %v188, 4294901760
  %v190 = vsub.f32 %v188, %v189
  %v191 = vand.u32 %v190, 4294901760
  %192 = vmatpush1.xpose.msra.mxu0 %v191
  %193 = vmatprep.subr.mxu0 0.0
  %194 = vmatpush1.xpose.msra.mxu0 0.0
  %195 = vmatprep.subr.mxu0 0.0
  %196 = vmatpush1.xpose.msra.mxu0 0.0
  %197 = vmatprep.subr.mxu0 0.0
  %198 = vmatpush1.xpose.msra.mxu0 0.0
  %199 = vmatprep.subr.mxu0 0.0
  %200 = vmatpush1.xpose.msra.mxu0 0.0
  %201 = vmatprep.subr.mxu0 0.0
  %202 = vmatpush1.xpose.msra.mxu0 0.0
  %203 = vmatprep.subr.mxu0 0.0
  %204 = vmatpush1.xpose.msra.mxu0 0.0
  %205 = vmatprep.subr.mxu0 0.0
  %206 = vmatpush1.xpose.msra.mxu0 0.0
  %207 = vmatprep.subr.mxu0 0.0
  %208 = vmatpush1.xpose.msra.mxu0 0.0
  %209 = vmatprep.subr.mxu0 0.0
  %210 = vmatpush1.xpose.msra.mxu0 0.0
  %211 = vmatprep.subr.mxu0 0.0
  %212 = vmatpush1.xpose.msra.mxu0 0.0
  %213 = vmatprep.subr.mxu0 0.0
  %214 = vmatpush1.xpose.msra.mxu0 0.0
  %215 = vmatprep.subr.mxu0 0.0
  %216 = vmatpush1.xpose.msra.mxu0 0.0
  %217 = vmatprep.subr.mxu0 0.0
  %218 = vmatpush1.xpose.msra.mxu0 0.0
  %219 = vmatprep.subr.mxu0 0.0
  %220 = vmatpush1.xpose.msra.mxu0 0.0
  %221 = vmatprep.subr.mxu0 0.0
  %222 = vmatpush1.xpose.msra.mxu0 0.0
  %223 = vmatprep.subr.mxu0 0.0
  %224 = vmatpush1.xpose.msra.mxu0 0.0
  %225 = vmatprep.subr.mxu0 0.0
  %226 = vmatpush1.xpose.msra.mxu0 0.0
  %227 = vmatprep.subr.mxu0 0.0
  %228 = vmatpush1.xpose.msra.mxu0 0.0
  %229 = vmatprep.subr.mxu0 0.0
  %230 = vmatpush1.xpose.msra.mxu0 0.0
  %231 = vmatprep.subr.mxu0 0.0
  %232 = vmatpush1.xpose.msra.mxu0 0.0
  %233 = vmatprep.subr.mxu0 0.0
  %234 = vmatpush1.xpose.msra.mxu0 0.0
  %235 = vmatprep.subr.mxu0 0.0
  %236 = vmatpush1.xpose.msra.mxu0 0.0
  %237 = vmatprep.subr.mxu0 0.0
  %238 = vmatpush1.xpose.msra.mxu0 0.0
  %239 = vmatprep.subr.mxu0 0.0
  %240 = vmatpush1.xpose.msra.mxu0 0.0
  %241 = vmatprep.mubr.f32.mxu0 0.0
  %v242 = vand.u32 %v28, 4294901760
  %243 = vmatmul.mubr.f32.gmra.mrb[0].mxu0 %v242
  %v244 = vpop.f32.mrb[0].mxu0
  %v245 = vadd.f32 %v134, %v244
  %v246 = vpop.f32.mrb[0].mxu0
  %247 = vdwg.mxu0
  %248 = vmatprep.subr.mxu0 0.0
  %v249 = vand.u32 %v31, 4294901760
  %v250 = vsub.f32 %v31, %v249
  %251 = vmatpush1.xpose.msra.mxu0 %v250
  %252 = vmatprep.subr.mxu0 0.0
  %v253 = vand.u32 %v34, 4294901760
  %v254 = vsub.f32 %v34, %v253
  %255 = vmatpush1.xpose.msra.mxu0 %v254
  %256 = vmatprep.subr.mxu0 0.0
  %v257 = vand.u32 %v37, 4294901760
  %v258 = vsub.f32 %v37, %v257
  %259 = vmatpush1.xpose.msra.mxu0 %v258
  %260 = vmatprep.subr.mxu0 0.0
  %v261 = vand.u32 %v40, 4294901760
  %v262 = vsub.f32 %v40, %v261
  %263 = vmatpush1.xpose.msra.mxu0 %v262
  %264 = vmatprep.subr.mxu0 0.0
  %v265 = vand.u32 %v43, 4294901760
  %v266 = vsub.f32 %v43, %v265
  %267 = vmatpush1.xpose.msra.mxu0 %v266
  %268 = vmatprep.subr.mxu0 0.0
  %v269 = vand.u32 %v46, 4294901760
  %v270 = vsub.f32 %v46, %v269
  %271 = vmatpush1.xpose.msra.mxu0 %v270
  %272 = vmatprep.subr.mxu0 0.0
  %v273 = vand.u32 %v49, 4294901760
  %v274 = vsub.f32 %v49, %v273
  %275 = vmatpush1.xpose.msra.mxu0 %v274
  %276 = vmatprep.subr.mxu0 0.0
  %v277 = vand.u32 %v52, 4294901760
  %v278 = vsub.f32 %v52, %v277
  %279 = vmatpush1.xpose.msra.mxu0 %v278
  %280 = vmatprep.subr.mxu0 0.0
  %281 = vmatpush1.xpose.msra.mxu0 0.0
  %282 = vmatprep.subr.mxu0 0.0
  %283 = vmatpush1.xpose.msra.mxu0 0.0
  %284 = vmatprep.subr.mxu0 0.0
  %285 = vmatpush1.xpose.msra.mxu0 0.0
  %286 = vmatprep.subr.mxu0 0.0
  %287 = vmatpush1.xpose.msra.mxu0 0.0
  %288 = vmatprep.subr.mxu0 0.0
  %289 = vmatpush1.xpose.msra.mxu0 0.0
  %290 = vmatprep.subr.mxu0 0.0
  %291 = vmatpush1.xpose.msra.mxu0 0.0
  %292 = vmatprep.subr.mxu0 0.0
  %293 = vmatpush1.xpose.msra.mxu0 0.0
  %294 = vmatprep.subr.mxu0 0.0
  %295 = vmatpush1.xpose.msra.mxu0 0.0
  %296 = vmatprep.subr.mxu0 0.0
  %297 = vmatpush1.xpose.msra.mxu0 0.0
  %298 = vmatprep.subr.mxu0 0.0
  %299 = vmatpush1.xpose.msra.mxu0 0.0
  %300 = vmatprep.subr.mxu0 0.0
  %301 = vmatpush1.xpose.msra.mxu0 0.0
  %302 = vmatprep.subr.mxu0 0.0
  %303 = vmatpush1.xpose.msra.mxu0 0.0
  %304 = vmatprep.subr.mxu0 0.0
  %305 = vmatpush1.xpose.msra.mxu0 0.0
  %306 = vmatprep.subr.mxu0 0.0
  %307 = vmatpush1.xpose.msra.mxu0 0.0
  %308 = vmatprep.subr.mxu0 0.0
  %309 = vmatpush1.xpose.msra.mxu0 0.0
  %310 = vmatprep.subr.mxu0 0.0
  %311 = vmatpush1.xpose.msra.mxu0 0.0
  %312 = vmatprep.subr.mxu0 0.0
  %313 = vmatpush1.xpose.msra.mxu0 0.0
  %314 = vmatprep.subr.mxu0 0.0
  %315 = vmatpush1.xpose.msra.mxu0 0.0
  %316 = vmatprep.subr.mxu0 0.0
  %317 = vmatpush1.xpose.msra.mxu0 0.0
  %318 = vmatprep.subr.mxu0 0.0
  %319 = vmatpush1.xpose.msra.mxu0 0.0
  %320 = vmatprep.subr.mxu0 0.0
  %321 = vmatpush1.xpose.msra.mxu0 0.0
  %322 = vmatprep.subr.mxu0 0.0
  %323 = vmatpush1.xpose.msra.mxu0 0.0
  %324 = vmatprep.subr.mxu0 0.0
  %325 = vmatpush1.xpose.msra.mxu0 0.0
  %326 = vmatprep.subr.mxu0 0.0
  %327 = vmatpush1.xpose.msra.mxu0 0.0
  %328 = vmatprep.mubr.f32.mxu0 0.0
  %v329 = vand.u32 %v28, 4294901760
  %v330 = vsub.f32 %v28, %v329
  %331 = vmatmul.mubr.f32.gmra.mrb[0].mxu0 %v330
  %v332 = vpop.f32.mrb[0].mxu0
  %v333 = vadd.f32 %v245, %v332
  %v334 = vpop.f32.mrb[0].mxu0
  %335 = vdwg.mxu0
  %336 = vmatprep.subr.mxu0 0.0
  %v337 = vand.u32 %v31, 4294901760
  %338 = vmatpush1.xpose.msra.mxu0 %v337
  %339 = vmatprep.subr.mxu0 0.0
  %v340 = vand.u32 %v34, 4294901760
  %341 = vmatpush1.xpose.msra.mxu0 %v340
  %342 = vmatprep.subr.mxu0 0.0
  %v343 = vand.u32 %v37, 4294901760
  %344 = vmatpush1.xpose.msra.mxu0 %v343
  %345 = vmatprep.subr.mxu0 0.0
  %v346 = vand.u32 %v40, 4294901760
  %347 = vmatpush1.xpose.msra.mxu0 %v346
  %348 = vmatprep.subr.mxu0 0.0
  %v349 = vand.u32 %v43, 4294901760
  %350 = vmatpush1.xpose.msra.mxu0 %v349
  %351 = vmatprep.subr.mxu0 0.0
  %v352 = vand.u32 %v46, 4294901760
  %353 = vmatpush1.xpose.msra.mxu0 %v352
  %354 = vmatprep.subr.mxu0 0.0
  %v355 = vand.u32 %v49, 4294901760
  %356 = vmatpush1.xpose.msra.mxu0 %v355
  %357 = vmatprep.subr.mxu0 0.0
  %v358 = vand.u32 %v52, 4294901760
  %359 = vmatpush1.xpose.msra.mxu0 %v358
  %360 = vmatprep.subr.mxu0 0.0
  %361 = vmatpush1.xpose.msra.mxu0 0.0
  %362 = vmatprep.subr.mxu0 0.0
  %363 = vmatpush1.xpose.msra.mxu0 0.0
  %364 = vmatprep.subr.mxu0 0.0
  %365 = vmatpush1.xpose.msra.mxu0 0.0
  %366 = vmatprep.subr.mxu0 0.0
  %367 = vmatpush1.xpose.msra.mxu0 0.0
  %368 = vmatprep.subr.mxu0 0.0
  %369 = vmatpush1.xpose.msra.mxu0 0.0
  %370 = vmatprep.subr.mxu0 0.0
  %371 = vmatpush1.xpose.msra.mxu0 0.0
  %372 = vmatprep.subr.mxu0 0.0
  %373 = vmatpush1.xpose.msra.mxu0 0.0
  %374 = vmatprep.subr.mxu0 0.0
  %375 = vmatpush1.xpose.msra.mxu0 0.0
  %376 = vmatprep.subr.mxu0 0.0
  %377 = vmatpush1.xpose.msra.mxu0 0.0
  %378 = vmatprep.subr.mxu0 0.0
  %379 = vmatpush1.xpose.msra.mxu0 0.0
  %380 = vmatprep.subr.mxu0 0.0
  %381 = vmatpush1.xpose.msra.mxu0 0.0
  %382 = vmatprep.subr.mxu0 0.0
  %383 = vmatpush1.xpose.msra.mxu0 0.0
  %384 = vmatprep.subr.mxu0 0.0
  %385 = vmatpush1.xpose.msra.mxu0 0.0
  %386 = vmatprep.subr.mxu0 0.0
  %387 = vmatpush1.xpose.msra.mxu0 0.0
  %388 = vmatprep.subr.mxu0 0.0
  %389 = vmatpush1.xpose.msra.mxu0 0.0
  %390 = vmatprep.subr.mxu0 0.0
  %391 = vmatpush1.xpose.msra.mxu0 0.0
  %392 = vmatprep.subr.mxu0 0.0
  %393 = vmatpush1.xpose.msra.mxu0 0.0
  %394 = vmatprep.subr.mxu0 0.0
  %395 = vmatpush1.xpose.msra.mxu0 0.0
  %396 = vmatprep.subr.mxu0 0.0
  %397 = vmatpush1.xpose.msra.mxu0 0.0
  %398 = vmatprep.subr.mxu0 0.0
  %399 = vmatpush1.xpose.msra.mxu0 0.0
  %400 = vmatprep.subr.mxu0 0.0
  %401 = vmatpush1.xpose.msra.mxu0 0.0
  %402 = vmatprep.subr.mxu0 0.0
  %403 = vmatpush1.xpose.msra.mxu0 0.0
  %404 = vmatprep.subr.mxu0 0.0
  %405 = vmatpush1.xpose.msra.mxu0 0.0
  %406 = vmatprep.subr.mxu0 0.0
  %407 = vmatpush1.xpose.msra.mxu0 0.0
  %408 = vmatprep.mubr.f32.mxu0 0.0
  %v409 = vand.u32 %v28, 4294901760
  %v410 = vsub.f32 %v28, %v409
  %v411 = vand.u32 %v410, 4294901760
  %412 = vmatmul.mubr.f32.gmra.mrb[0].mxu0 %v411
  %v413 = vpop.f32.mrb[0].mxu0
  %v414 = vadd.f32 %v333, %v413
  %v415 = vpop.f32.mrb[0].mxu0
  %416 = vdwg.mxu0
  %417 = vmatprep.subr.mxu0 0.0
  %v418 = vand.u32 %v31, 4294901760
  %v419 = vsub.f32 %v31, %v418
  %v420 = vand.u32 %v419, 4294901760
  %421 = vmatpush1.xpose.msra.mxu0 %v420
  %422 = vmatprep.subr.mxu0 0.0
  %v423 = vand.u32 %v34, 4294901760
  %v424 = vsub.f32 %v34, %v423
  %v425 = vand.u32 %v424, 4294901760
  %426 = vmatpush1.xpose.msra.mxu0 %v425
  %427 = vmatprep.subr.mxu0 0.0
  %v428 = vand.u32 %v37, 4294901760
  %v429 = vsub.f32 %v37, %v428
  %v430 = vand.u32 %v429, 4294901760
  %431 = vmatpush1.xpose.msra.mxu0 %v430
  %432 = vmatprep.subr.mxu0 0.0
  %v433 = vand.u32 %v40, 4294901760
  %v434 = vsub.f32 %v40, %v433
  %v435 = vand.u32 %v434, 4294901760
  %436 = vmatpush1.xpose.msra.mxu0 %v435
  %437 = vmatprep.subr.mxu0 0.0
  %v438 = vand.u32 %v43, 4294901760
  %v439 = vsub.f32 %v43, %v438
  %v440 = vand.u32 %v439, 4294901760
  %441 = vmatpush1.xpose.msra.mxu0 %v440
  %442 = vmatprep.subr.mxu0 0.0
  %v443 = vand.u32 %v46, 4294901760
  %v444 = vsub.f32 %v46, %v443
  %v445 = vand.u32 %v444, 4294901760
  %446 = vmatpush1.xpose.msra.mxu0 %v445
  %447 = vmatprep.subr.mxu0 0.0
  %v448 = vand.u32 %v49, 4294901760
  %v449 = vsub.f32 %v49, %v448
  %v450 = vand.u32 %v449, 4294901760
  %451 = vmatpush1.xpose.msra.mxu0 %v450
  %452 = vmatprep.subr.mxu0 0.0
  %v453 = vand.u32 %v52, 4294901760
  %v454 = vsub.f32 %v52, %v453
  %v455 = vand.u32 %v454, 4294901760
  %456 = vmatpush1.xpose.msra.mxu0 %v455
  %457 = vmatprep.subr.mxu0 0.0
  %458 = vmatpush1.xpose.msra.mxu0 0.0
  %459 = vmatprep.subr.mxu0 0.0
  %460 = vmatpush1.xpose.msra.mxu0 0.0
  %461 = vmatprep.subr.mxu0 0.0
  %462 = vmatpush1.xpose.msra.mxu0 0.0
  %463 = vmatprep.subr.mxu0 0.0
  %464 = vmatpush1.xpose.msra.mxu0 0.0
  %465 = vmatprep.subr.mxu0 0.0
  %466 = vmatpush1.xpose.msra.mxu0 0.0
  %467 = vmatprep.subr.mxu0 0.0
  %468 = vmatpush1.xpose.msra.mxu0 0.0
  %469 = vmatprep.subr.mxu0 0.0
  %470 = vmatpush1.xpose.msra.mxu0 0.0
  %471 = vmatprep.subr.mxu0 0.0
  %472 = vmatpush1.xpose.msra.mxu0 0.0
  %473 = vmatprep.subr.mxu0 0.0
  %474 = vmatpush1.xpose.msra.mxu0 0.0
  %475 = vmatprep.subr.mxu0 0.0
  %476 = vmatpush1.xpose.msra.mxu0 0.0
  %477 = vmatprep.subr.mxu0 0.0
  %478 = vmatpush1.xpose.msra.mxu0 0.0
  %479 = vmatprep.subr.mxu0 0.0
  %480 = vmatpush1.xpose.msra.mxu0 0.0
  %481 = vmatprep.subr.mxu0 0.0
  %482 = vmatpush1.xpose.msra.mxu0 0.0
  %483 = vmatprep.subr.mxu0 0.0
  %484 = vmatpush1.xpose.msra.mxu0 0.0
  %485 = vmatprep.subr.mxu0 0.0
  %486 = vmatpush1.xpose.msra.mxu0 0.0
  %487 = vmatprep.subr.mxu0 0.0
  %488 = vmatpush1.xpose.msra.mxu0 0.0
  %489 = vmatprep.subr.mxu0 0.0
  %490 = vmatpush1.xpose.msra.mxu0 0.0
  %491 = vmatprep.subr.mxu0 0.0
  %492 = vmatpush1.xpose.msra.mxu0 0.0
  %493 = vmatprep.subr.mxu0 0.0
  %494 = vmatpush1.xpose.msra.mxu0 0.0
  %495 = vmatprep.subr.mxu0 0.0
  %496 = vmatpush1.xpose.msra.mxu0 0.0
  %497 = vmatprep.subr.mxu0 0.0
  %498 = vmatpush1.xpose.msra.mxu0 0.0
  %499 = vmatprep.subr.mxu0 0.0
  %500 = vmatpush1.xpose.msra.mxu0 0.0
  %501 = vmatprep.subr.mxu0 0.0
  %502 = vmatpush1.xpose.msra.mxu0 0.0
  %503 = vmatprep.subr.mxu0 0.0
  %504 = vmatpush1.xpose.msra.mxu0 0.0
  %505 = vmatprep.mubr.f32.mxu0 0.0
  %v506 = vand.u32 %v28, 4294901760
  %507 = vmatmul.mubr.f32.gmra.mrb[0].mxu0 %v506
  %v508 = vpop.f32.mrb[0].mxu0
  %v509 = vadd.f32 %v414, %v508
  %v510 = vpop.f32.mrb[0].mxu0
  %511 = vdwg.mxu0
  %512 = vmatprep.subr.mxu0 0.0
  %v513 = vand.u32 %v31, 4294901760
  %514 = vmatpush1.xpose.msra.mxu0 %v513
  %515 = vmatprep.subr.mxu0 0.0
  %v516 = vand.u32 %v34, 4294901760
  %517 = vmatpush1.xpose.msra.mxu0 %v516
  %518 = vmatprep.subr.mxu0 0.0
  %v519 = vand.u32 %v37, 4294901760
  %520 = vmatpush1.xpose.msra.mxu0 %v519
  %521 = vmatprep.subr.mxu0 0.0
  %v522 = vand.u32 %v40, 4294901760
  %523 = vmatpush1.xpose.msra.mxu0 %v522
  %524 = vmatprep.subr.mxu0 0.0
  %v525 = vand.u32 %v43, 4294901760
  %526 = vmatpush1.xpose.msra.mxu0 %v525
  %527 = vmatprep.subr.mxu0 0.0
  %v528 = vand.u32 %v46, 4294901760
  %529 = vmatpush1.xpose.msra.mxu0 %v528
  %530 = vmatprep.subr.mxu0 0.0
  %v531 = vand.u32 %v49, 4294901760
  %532 = vmatpush1.xpose.msra.mxu0 %v531
  %533 = vmatprep.subr.mxu0 0.0
  %v534 = vand.u32 %v52, 4294901760
  %535 = vmatpush1.xpose.msra.mxu0 %v534
  %536 = vmatprep.subr.mxu0 0.0
  %537 = vmatpush1.xpose.msra.mxu0 0.0
  %538 = vmatprep.subr.mxu0 0.0
  %539 = vmatpush1.xpose.msra.mxu0 0.0
  %540 = vmatprep.subr.mxu0 0.0
  %541 = vmatpush1.xpose.msra.mxu0 0.0
  %542 = vmatprep.subr.mxu0 0.0
  %543 = vmatpush1.xpose.msra.mxu0 0.0
  %544 = vmatprep.subr.mxu0 0.0
  %545 = vmatpush1.xpose.msra.mxu0 0.0
  %546 = vmatprep.subr.mxu0 0.0
  %547 = vmatpush1.xpose.msra.mxu0 0.0
  %548 = vmatprep.subr.mxu0 0.0
  %549 = vmatpush1.xpose.msra.mxu0 0.0
  %550 = vmatprep.subr.mxu0 0.0
  %551 = vmatpush1.xpose.msra.mxu0 0.0
  %552 = vmatprep.subr.mxu0 0.0
  %553 = vmatpush1.xpose.msra.mxu0 0.0
  %554 = vmatprep.subr.mxu0 0.0
  %555 = vmatpush1.xpose.msra.mxu0 0.0
  %556 = vmatprep.subr.mxu0 0.0
  %557 = vmatpush1.xpose.msra.mxu0 0.0
  %558 = vmatprep.subr.mxu0 0.0
  %559 = vmatpush1.xpose.msra.mxu0 0.0
  %560 = vmatprep.subr.mxu0 0.0
  %561 = vmatpush1.xpose.msra.mxu0 0.0
  %562 = vmatprep.subr.mxu0 0.0
  %563 = vmatpush1.xpose.msra.mxu0 0.0
  %564 = vmatprep.subr.mxu0 0.0
  %565 = vmatpush1.xpose.msra.mxu0 0.0
  %566 = vmatprep.subr.mxu0 0.0
  %567 = vmatpush1.xpose.msra.mxu0 0.0
  %568 = vmatprep.subr.mxu0 0.0
  %569 = vmatpush1.xpose.msra.mxu0 0.0
  %570 = vmatprep.subr.mxu0 0.0
  %571 = vmatpush1.xpose.msra.mxu0 0.0
  %572 = vmatprep.subr.mxu0 0.0
  %573 = vmatpush1.xpose.msra.mxu0 0.0
  %574 = vmatprep.subr.mxu0 0.0
  %575 = vmatpush1.xpose.msra.mxu0 0.0
  %576 = vmatprep.subr.mxu0 0.0
  %577 = vmatpush1.xpose.msra.mxu0 0.0
  %578 = vmatprep.subr.mxu0 0.0
  %579 = vmatpush1.xpose.msra.mxu0 0.0
  %580 = vmatprep.subr.mxu0 0.0
  %581 = vmatpush1.xpose.msra.mxu0 0.0
  %582 = vmatprep.subr.mxu0 0.0
  %583 = vmatpush1.xpose.msra.mxu0 0.0
  %584 = vmatprep.mubr.f32.mxu0 0.0
  %v585 = vand.u32 %v28, 4294901760
  %586 = vmatmul.mubr.f32.gmra.mrb[0].mxu0 %v585
  %v587 = vpop.f32.mrb[0].mxu0
  %v588 = vadd.f32 %v509, %v587
  %v589 = vpop.f32.mrb[0].mxu0
  %590 = vdwg.mxu0
  %v591 = vlaneseq
  %v592 = vand.u32 %v591, 127
  %v593 = vld [vmem:[%s1] sm:$0xff]
  %594 = vset.pattern.permute.xlu0 0
  %595 = vperm.xlu0 %594, %v593
  %v596 = vpop.permute.xlu0 %595
  %vm597 = vcmp.eq.s32.totalorder %v592, %v596
  %v598 = vsel %vm597, %v588, 0.0
  %vm599 = vcmask 523264
  %v600 = vsel %vm599, %v598, 0.0
  %601 = vadd.xlane.f32.xlu0 %v600
  %v602 = vpop.xlane.xlu0 %601
  %v603 = vmin.f32 %v602, 0.0
  %v604 = vand.u32 2147483647, %v602
  %v605 = vsub.f32 0.0, %v604
  %v606 = vmul.f32 %v605, 1.442695
  %v607 = vpow.pop %v606
  %v608 = vadd.f32 %v607, 1.0
  %v609 = vlog2.pop %v608
  %v610 = vmul.f32 %v609, 0.6931472
  %v611 = vsub.f32 %v603, %v610
  %v612 = vld [vmem:[%s2] sm:$0xff]
  %613 = vset.pattern.permute.xlu0 0
  %614 = vperm.xlu0 %613, %v612
  %v615 = vpop.permute.xlu0 %614
  %vm616 = vcmp.eq.s32.totalorder %v592, %v615
  %v617 = vsel %vm616, %v588, 0.0
  %v618 = vsel %vm599, %v617, 0.0
  %619 = vadd.xlane.f32.xlu0 %v618
  %v620 = vpop.xlane.xlu0 %619
  %v621 = vsub.f32 0.0, %v620
  %v622 = vmin.f32 %v621, 0.0
  %v623 = vand.u32 2147483647, %v621
  %v624 = vsub.f32 0.0, %v623
  %v625 = vmul.f32 %v624, 1.442695
  %v626 = vpow.pop %v625
  %v627 = vadd.f32 %v626, 1.0
  %v628 = vlog2.pop %v627
  %v629 = vmul.f32 %v628, 0.6931472
  %v630 = vsub.f32 %v622, %v629
  %v631 = vadd.f32 %v611, %v630
  %632 = vset.pattern.permute.xlu0 1
  %633 = vperm.xlu0 %632, %v612
  %v634 = vpop.permute.xlu0 %633
  %vm635 = vcmp.eq.s32.totalorder %v592, %v634
  %v636 = vsel %vm635, %v588, 0.0
  %v637 = vsel %vm599, %v636, 0.0
  %638 = vadd.xlane.f32.xlu0 %v637
  %v639 = vpop.xlane.xlu0 %638
  %v640 = vsub.f32 0.0, %v639
  %v641 = vmin.f32 %v640, 0.0
  %v642 = vand.u32 2147483647, %v640
  %v643 = vsub.f32 0.0, %v642
  %v644 = vmul.f32 %v643, 1.442695
  %v645 = vpow.pop %v644
  %v646 = vadd.f32 %v645, 1.0
  %v647 = vlog2.pop %v646
  %v648 = vmul.f32 %v647, 0.6931472
  %v649 = vsub.f32 %v641, %v648
  %v650 = vadd.f32 %v631, %v649
  %651 = vset.pattern.permute.xlu0 2
  %652 = vperm.xlu0 %651, %v612
  %v653 = vpop.permute.xlu0 %652
  %vm654 = vcmp.eq.s32.totalorder %v592, %v653
  %v655 = vsel %vm654, %v588, 0.0
  %v656 = vsel %vm599, %v655, 0.0
  %657 = vadd.xlane.f32.xlu0 %v656
  %v658 = vpop.xlane.xlu0 %657
  %v659 = vsub.f32 0.0, %v658
  %v660 = vmin.f32 %v659, 0.0
  %v661 = vand.u32 2147483647, %v659
  %v662 = vsub.f32 0.0, %v661
  %v663 = vmul.f32 %v662, 1.442695
  %v664 = vpow.pop %v663
  %v665 = vadd.f32 %v664, 1.0
  %v666 = vlog2.pop %v665
  %v667 = vmul.f32 %v666, 0.6931472
  %v668 = vsub.f32 %v660, %v667
  %v669 = vadd.f32 %v650, %v668
  %670 = vset.pattern.permute.xlu0 3
  %671 = vperm.xlu0 %670, %v612
  %v672 = vpop.permute.xlu0 %671
  %vm673 = vcmp.eq.s32.totalorder %v592, %v672
  %v674 = vsel %vm673, %v588, 0.0
  %v675 = vsel %vm599, %v674, 0.0
  %676 = vadd.xlane.f32.xlu0 %v675
  %v677 = vpop.xlane.xlu0 %676
  %v678 = vsub.f32 0.0, %v677
  %v679 = vmin.f32 %v678, 0.0
  %v680 = vand.u32 2147483647, %v678
  %v681 = vsub.f32 0.0, %v680
  %v682 = vmul.f32 %v681, 1.442695
  %v683 = vpow.pop %v682
  %v684 = vadd.f32 %v683, 1.0
  %v685 = vlog2.pop %v684
  %v686 = vmul.f32 %v685, 0.6931472
  %v687 = vsub.f32 %v679, %v686
  %v688 = vadd.f32 %v669, %v687
  %s689 = smul.u32 0, 8
  %v690 = vlaneseq
  %v691 = vshrl.u32 %v690, 7
  %v692 = vstv %s689
  %v693 = vadd.s32 %v692, %v691
  %vm694 = vcmp.lt.s32.totalorder %v693, 8
  %v695 = vsel %vm694, %v688, 0.0
  %vm696 = vcmask 7168
  %697 = vst.msk [vmem:[%s4] sm:$0xff] %vm696, %v695
  // Predicated region
  $region18: #{tpu_custom_call.1} parent=0 // pred_check
    _
  $region19: #{tpu_custom_call.1} parent=0 // pred_check_branch
    %699 = sbr.rel (0) target = $region21
  $region20: #{tpu_custom_call.1} parent=0 // pred_region
    _
  $region21: #{tpu_custom_call.1} parent=0 // pred_fallthru
    _
  // Predicated region
  $region22: #{tpu_custom_call.1} parent=0 // pred_check
    _
  $region23: #{tpu_custom_call.1} parent=0 // pred_check_branch
    %701 = sbr.rel (0) target = $region25
  $region24: #{tpu_custom_call.1} parent=0 // pred_region
    _
  $region25: #{tpu_custom_call.1} parent=0 // pred_fallthru
    _

</llo_original>
